<compile_context>
chip_gen: v7x
topology: tpu7x:2x2x1
jax: 0.10.0
libtpu: 0.0.40
codegen_flags: <defaults>
</compile_context>

<pallas_src>
import jax
import jax.numpy as jnp
from jax import lax
from jax.experimental import pallas as pl
from jax.experimental.pallas import tpu as pltpu


def _round_up(x, m):
    return (x + m - 1) // m * m


def _pad2d(a, rows, cols):
    """Zero-pad a 2-D array up to (rows, cols); no copy when already sized."""
    if a.shape == (rows, cols):
        return a
    return jnp.zeros((rows, cols), a.dtype).at[:a.shape[0], :a.shape[1]].set(a)


def _pick_t_blk(S, B_TILE, Hp, scratch_budget_bytes=8 * 1024 * 1024):
    """Largest time block whose hidden-sequence scratch fits the budget,
    preferring blocks that divide S (no per-step tail mask on the hot path)."""
    cands = [c for c in (128, 64, 32, 16, 8, 4, 2, 1) if c <= S] or [1]
    fits = [c for c in cands if 2 * c * B_TILE * Hp * 4 <= scratch_budget_bytes]
    if not fits:
        fits = [cands[-1]]
    for c in fits:
        if S % c == 0:
            return c
    return fits[0]


def _make_rnn_kernel(T_BLK, B_TILE, S, need_mask, hoist_wh, unroll):
    def rnn_kernel(x_ref, wh_ref, ux_ref, bh_ref, vo_ref, co_ref, h0_ref,
                   out_ref, hfin_ref, h_carry, u_scr, hseq_scr):
        tb = pl.program_id(1)                    # time-block index (inner axis)
        mx_dtype = wh_ref.dtype                  # matmul input dtype (f32/bf16)

        # h0 at the first time block of every batch tile.
        @pl.when(tb == 0)
        def _():
            h_carry[...] = h0_ref[...]

        # ---- Pre-GEMM (time-parallel): U = X_blk @ Ux + bh -----------------
        x2d = x_ref[...].reshape(T_BLK * B_TILE, x_ref.shape[-1])
        u2d = bh_ref[...] + jnp.dot(x2d, ux_ref[...],
                                    preferred_element_type=jnp.float32)
        u_scr[...] = u2d.reshape(T_BLK, B_TILE, u_scr.shape[-1])

        # Hoist Wh into vregs only when small; otherwise re-read from VMEM each
        # step so the unrolled recurrence does not spill.
        wh_val = wh_ref[...] if hoist_wh else None

        # ---- Recurrence: only ht @ Wh + tanh is truly sequential ------------
        # TODO(synk): on v7x, drive the MXU result buffer directly
        # (matmul_push_rhs / matmul_acc_lhs) so `u + ht@Wh` accumulates in the
        # MRB instead of a VPU add on the serial critical path.
        def step(t, ht):
            wh = wh_val if hoist_wh else wh_ref[...]
            at = u_scr[t] + jnp.dot(ht.astype(mx_dtype), wh,
                                    preferred_element_type=jnp.float32)
            ht_new = jnp.tanh(at)
            if need_mask:
                # Padded (beyond-S) steps must not advance the hidden state.
                valid = (tb * T_BLK + t) < S
                ht_new = jnp.where(valid, ht_new, ht)
            hseq_scr[t] = ht_new
            return ht_new

        ht_final = lax.fori_loop(0, T_BLK, step, h_carry[...], unroll=unroll)
        h_carry[...] = ht_final

        # ---- Post-GEMM (time-parallel): Y = Hseq @ Vo + co -------------------
        h2d = hseq_scr[...].reshape(T_BLK * B_TILE, hseq_scr.shape[-1])
        y2d = co_ref[...] + jnp.dot(h2d.astype(mx_dtype), vo_ref[...],
                                    preferred_element_type=jnp.float32)
        out_ref[...] = y2d.reshape(
            T_BLK, B_TILE, y2d.shape[-1]).astype(out_ref.dtype)

        # Final hidden is a resident output block; write it once per batch tile.
        @pl.when(tb == pl.num_programs(1) - 1)
        def _():
            hfin_ref[...] = ht_final.astype(hfin_ref.dtype)

    return rnn_kernel


def rnn_forward(inputs, Wh, Ux, bh, Vo, co, h0=None, *,
                param_dtype=jnp.float32, out_dtype=jnp.float32,
                batch_tile=256):
    """inputs: (S, B, I) f32. Returns (outputs (S,B,O), h_final (B,H)).

    param_dtype=jnp.bfloat16 casts weights / matmul activations to bf16
    (recommended on v6e/v7x); accumulation, biases and tanh stay in f32.
    out_dtype=jnp.bfloat16 halves output HBM writeback (useful on v5e/v6e).
    """
    S, B, I = inputs.shape
    H = Wh.shape[0]
    O = Vo.shape[1]

    # --- Padded / tiled geometry -------------------------------------------
    Hp = _round_up(H, 128)                       # hidden lanes (MXU contraction)
    # Keep O unpadded when it is small: the block then spans the full dim
    # (allowed) and we avoid 128/O x HBM write amplification on the outputs.
    Op = O if (O % 128 == 0 or O < 128) else _round_up(O, 128)

    if B <= batch_tile:
        Bp = _round_up(B, 8)                     # sublane multiple
        B_TILE = Bp
    else:
        B_TILE = _round_up(batch_tile, 8)
        Bp = _round_up(B, B_TILE)

    T_BLK = _pick_t_blk(S, B_TILE, Hp)
    S_pad = _round_up(S, T_BLK)
    need_mask = (S_pad != S)

    # --- Operand padding (skipped entirely when already aligned) ------------
    x_f32 = inputs.astype(jnp.float32)
    if (S_pad, Bp) != (S, B):
        x_p = jnp.zeros((S_pad, Bp, I), jnp.float32).at[:S, :B, :].set(x_f32)
    else:
        x_p = x_f32
    x_p = x_p.astype(param_dtype)

    Wh_p = _pad2d(Wh.astype(jnp.float32), Hp, Hp).astype(param_dtype)
    Ux_p = _pad2d(Ux.astype(jnp.float32), I, Hp).astype(param_dtype)
    Vo_p = _pad2d(Vo.astype(jnp.float32), Hp, Op).astype(param_dtype)
    bh_p = _pad2d(bh.astype(jnp.float32).reshape(1, -1), 1, Hp)   # biases f32
    co_p = _pad2d(co.astype(jnp.float32).reshape(1, -1), 1, Op)
    if h0 is None:
        h0_p = jnp.zeros((Bp, Hp), jnp.float32)
    else:
        h0_p = _pad2d(h0.astype(jnp.float32), Bp, Hp)

    # --- Kernel configuration -----------------------------------------------
    p_bytes = jnp.dtype(param_dtype).itemsize
    o_bytes = jnp.dtype(out_dtype).itemsize
    hoist_wh = Hp * Hp * p_bytes <= 16 * 4096      # keep Wh live only if <=16 vregs
    unroll = True if Hp <= 512 else 8              # cap unroll for large hidden

    kernel = _make_rnn_kernel(T_BLK, B_TILE, S, need_mask, hoist_wh, unroll)

    # VMEM footprint: double-buffered streamed blocks + resident weights +
    # scratch.  Raise the scoped limit so realistic H does not hit the default
    # (16 MiB v5e / 32 MiB v6e-v7x).
    weights_b = (Hp * Hp + I * Hp + Hp * Op) * p_bytes + (Hp + Op) * 4
    stream_b = 2 * (T_BLK * B_TILE * I * p_bytes
                    + T_BLK * B_TILE * Op * o_bytes
                    + 2 * B_TILE * Hp * 4)         # h0 in + hfin out
    scratch_b = (B_TILE * Hp + 2 * T_BLK * B_TILE * Hp) * 4
    footprint = 2 * weights_b + stream_b + scratch_b
    vmem_limit = int(min(max(int(footprint * 1.5), 32 * 1024 * 1024),
                         100 * 1024 * 1024))

    grid_spec = pltpu.PrefetchScalarGridSpec(
        num_scalar_prefetch=0,
        grid=(Bp // B_TILE, S_pad // T_BLK),
        in_specs=[
            pl.BlockSpec((T_BLK, B_TILE, I), lambda b, t: (t, b, 0)),   # x block
            # Resident operands (constant index maps).  On v7x also consider
            # pipeline_mode=pl.Buffered(1) + bf16 weights to halve their VMEM.
            pl.BlockSpec((Hp, Hp), lambda b, t: (0, 0)),                # Wh
            pl.BlockSpec((I, Hp), lambda b, t: (0, 0)),                 # Ux
            pl.BlockSpec((1, Hp), lambda b, t: (0, 0)),                 # bh
            pl.BlockSpec((Hp, Op), lambda b, t: (0, 0)),                # Vo
            pl.BlockSpec((1, Op), lambda b, t: (0, 0)),                 # co
            pl.BlockSpec((B_TILE, Hp), lambda b, t: (b, 0)),            # h0
        ],
        out_specs=[
            pl.BlockSpec((T_BLK, B_TILE, Op), lambda b, t: (t, b, 0)),  # outputs
            pl.BlockSpec((B_TILE, Hp), lambda b, t: (b, 0)),            # final h
        ],
        scratch_shapes=[
            pltpu.VMEM((B_TILE, Hp), jnp.float32),          # carried ht
            pltpu.VMEM((T_BLK, B_TILE, Hp), jnp.float32),   # U = x@Ux + bh
            pltpu.VMEM((T_BLK, B_TILE, Hp), jnp.float32),   # hidden sequence
        ],
    )

    out3d, hfin = pl.pallas_call(
        kernel,
        out_shape=(
            jax.ShapeDtypeStruct((S_pad, Bp, Op), out_dtype),
            jax.ShapeDtypeStruct((Bp, Hp), jnp.float32),
        ),
        grid_spec=grid_spec,
        compiler_params=pltpu.CompilerParams(
            # Batch tiles are independent (megacore-parallel on v7x);
            # time is the inherently sequential recurrence.
            dimension_semantics=("parallel", "arbitrary"),
            vmem_limit_bytes=vmem_limit,
        ),
    )(x_p, Wh_p, Ux_p, bh_p, Vo_p, co_p, h0_p)

    outputs = out3d if (S_pad, Bp, Op) == (S, B, O) else out3d[:S, :B, :O]
    h_final = hfin if (Bp, Hp) == (B, H) else hfin[:B, :H]
    return outputs, h_final


def rnn_reference(inputs, Wh, Ux, bh, Vo, co):
    """Pure-JAX reference mirroring the PyTorch loop."""
    S, B, I = inputs.shape
    H = Wh.shape[0]
    ht = jnp.zeros((B, H), jnp.float32)
    outs = []
    for t in range(S):
        xt = inputs[t]
        at = bh + ht @ Wh + xt @ Ux
        ht = jnp.tanh(at)
        outs.append(co + ht @ Vo)
    return jnp.stack(outs), ht


if __name__ == "__main__":
    # Small shapes consistent with the module's forward contract.
    seq_len, batch, input_size, hidden_size, output_size = 8, 2, 4, 32, 16

    key = jax.random.PRNGKey(0)
    k_x, k_wh, k_ux, k_bh, k_vo, k_co = jax.random.split(key, 6)

    x = jax.random.normal(k_x, (seq_len, batch, input_size), jnp.float32)
    Wh = jax.random.normal(k_wh, (hidden_size, hidden_size), jnp.float32)
    Ux = jax.random.normal(k_ux, (input_size, hidden_size), jnp.float32)
    bh = jax.random.normal(k_bh, (hidden_size,), jnp.float32)
    Vo = jax.random.normal(k_vo, (hidden_size, output_size), jnp.float32)
    co = jax.random.normal(k_co, (output_size,), jnp.float32)

    # f32 parameter path for the tight self-check (pass param_dtype=jnp.bfloat16
    # on v6e/v7x for ~2x MXU throughput; loosen tolerances accordingly).
    outs, h_final = rnn_forward(x, Wh, Ux, bh, Vo, co)
    outs = jax.block_until_ready(outs)
    h_final = jax.block_until_ready(h_final)

    ref_outs, ref_h = rnn_reference(x, Wh, Ux, bh, Vo, co)
    assert jnp.allclose(outs, ref_outs, atol=1e-4, rtol=1e-4), float(
        jnp.max(jnp.abs(outs - ref_outs)))
    assert jnp.allclose(h_final, ref_h, atol=1e-4, rtol=1e-4), float(
        jnp.max(jnp.abs(h_final - ref_h)))

    print("KERNEL_OK")
</pallas_src>

<mosaic_0001>
module attributes {stable_mosaic.version = 11 : i64} {
  func.func @rnn_kernel(%arg0: i32, %arg1: i32, %arg2: memref<8x8x4xf32, #tpu.memory_space<vmem>>, %arg3: memref<128x128xf32, #tpu.memory_space<vmem>>, %arg4: memref<4x128xf32, #tpu.memory_space<vmem>>, %arg5: memref<1x128xf32, #tpu.memory_space<vmem>>, %arg6: memref<128x16xf32, #tpu.memory_space<vmem>>, %arg7: memref<1x16xf32, #tpu.memory_space<vmem>>, %arg8: memref<8x128xf32, #tpu.memory_space<vmem>>, %arg9: memref<8x8x16xf32, #tpu.memory_space<vmem>>, %arg10: memref<8x128xf32, #tpu.memory_space<vmem>>, %arg11: memref<8x128xf32, #tpu.memory_space<vmem>>, %arg12: memref<8x8x128xf32, #tpu.memory_space<vmem>>, %arg13: memref<8x8x128xf32, #tpu.memory_space<vmem>>) attributes {dimension_semantics = [#tpu.dimension_semantics<parallel>, #tpu.dimension_semantics<arbitrary>], iteration_bounds = array<i64: 1, 1>, scalar_prefetch = 0 : i64, scratch_operands = 3 : i64, tpu.core_type = #tpu.core_type<tc>, window_params = [{transform_indices = @transform_0, window_bounds = array<i64: 8, 8, 4>}, {pipeline_mode = #tpu.pipeline_mode<synchronous>, transform_indices = @transform_1, window_bounds = array<i64: 128, 128>}, {pipeline_mode = #tpu.pipeline_mode<synchronous>, transform_indices = @transform_2, window_bounds = array<i64: 4, 128>}, {pipeline_mode = #tpu.pipeline_mode<synchronous>, transform_indices = @transform_3, window_bounds = array<i64: 1, 128>}, {pipeline_mode = #tpu.pipeline_mode<synchronous>, transform_indices = @transform_4, window_bounds = array<i64: 128, 16>}, {pipeline_mode = #tpu.pipeline_mode<synchronous>, transform_indices = @transform_5, window_bounds = array<i64: 1, 16>}, {transform_indices = @transform_6, window_bounds = array<i64: 8, 128>}, {transform_indices = @transform_7, window_bounds = array<i64: 8, 8, 16>}, {transform_indices = @transform_8, window_bounds = array<i64: 8, 128>}]} {
    %c0_i32 = arith.constant 0 : i32
    %0 = arith.cmpi eq, %arg1, %c0_i32 : i32
    %1 = arith.extui %0 : i1 to i32
    %c0_i32_0 = arith.constant 0 : i32
    %2 = arith.cmpi ne, %1, %c0_i32_0 : i32
    scf.if %2 {
      %c0_70 = arith.constant 0 : index
      %c0_71 = arith.constant 0 : index
      %107 = vector.load %arg8[%c0_70, %c0_71] : memref<8x128xf32, #tpu.memory_space<vmem>>, vector<8x128xf32>
      %c0_72 = arith.constant 0 : index
      %c0_73 = arith.constant 0 : index
      %108 = vector.load %arg11[%c0_72, %c0_73] : memref<8x128xf32, #tpu.memory_space<vmem>>, vector<8x128xf32>
      tpu.vector_store %arg11[%c0_72, %c0_73], %107 {strides = array<i32>} : memref<8x128xf32, #tpu.memory_space<vmem>>, vector<8x128xf32>,
    } else {
    }
    %c0 = arith.constant 0 : index
    %c0_1 = arith.constant 0 : index
    %c0_2 = arith.constant 0 : index
    %3 = vector.load %arg2[%c0, %c0_1, %c0_2] : memref<8x8x4xf32, #tpu.memory_space<vmem>>, vector<8x8x4xf32>
    %4 = vector.shape_cast %3 : vector<8x8x4xf32> to vector<64x4xf32>
    %c0_3 = arith.constant 0 : index
    %c0_4 = arith.constant 0 : index
    %5 = vector.load %arg5[%c0_3, %c0_4] : memref<1x128xf32, #tpu.memory_space<vmem>>, vector<1x128xf32>
    %c0_5 = arith.constant 0 : index
    %c0_6 = arith.constant 0 : index
    %6 = vector.load %arg4[%c0_5, %c0_6] : memref<4x128xf32, #tpu.memory_space<vmem>>, vector<4x128xf32>
    %cst = arith.constant dense<0.000000e+00> : vector<64x128xf32>
    %7 = tpu.matmul %4, %6, %cst {dimension_numbers = #tpu.dot_dimension_numbers<[1], [0], [0], [1], [0, 0, 1, 1], [], []>} : vector<64x4xf32>, vector<4x128xf32>, vector<64x128xf32> -> vector<64x128xf32>
    %8 = vector.broadcast %5 : vector<1x128xf32> to vector<64x128xf32>
    %9 = arith.addf %8, %7 : vector<64x128xf32>
    %10 = vector.shape_cast %9 : vector<64x128xf32> to vector<8x8x128xf32>
    %c0_7 = arith.constant 0 : index
    %c0_8 = arith.constant 0 : index
    %c0_9 = arith.constant 0 : index
    %11 = vector.load %arg12[%c0_7, %c0_8, %c0_9] : memref<8x8x128xf32, #tpu.memory_space<vmem>>, vector<8x8x128xf32>
    tpu.vector_store %arg12[%c0_7, %c0_8, %c0_9], %10 {strides = array<i32>} : memref<8x8x128xf32, #tpu.memory_space<vmem>>, vector<8x8x128xf32>,
    %c0_10 = arith.constant 0 : index
    %c0_11 = arith.constant 0 : index
    %12 = vector.load %arg3[%c0_10, %c0_11] : memref<128x128xf32, #tpu.memory_space<vmem>>, vector<128x128xf32>
    %c0_12 = arith.constant 0 : index
    %c0_13 = arith.constant 0 : index
    %13 = vector.load %arg11[%c0_12, %c0_13] : memref<8x128xf32, #tpu.memory_space<vmem>>, vector<8x128xf32>
    %c0_i32_14 = arith.constant 0 : i32
    %14 = arith.index_cast %c0_i32_14 : i32 to index
    %c0_15 = arith.constant 0 : index
    %c0_16 = arith.constant 0 : index
    %15 = vector.load %arg12[%14, %c0_15, %c0_16] : memref<8x8x128xf32, #tpu.memory_space<vmem>>, vector<1x8x128xf32>
    %16 = vector.shape_cast %15 : vector<1x8x128xf32> to vector<8x128xf32>
    %cst_17 = arith.constant dense<0.000000e+00> : vector<8x128xf32>
    %17 = tpu.matmul %13, %12, %cst_17 {dimension_numbers = #tpu.dot_dimension_numbers<[1], [0], [0], [1], [0, 0, 1, 1], [], []>} : vector<8x128xf32>, vector<128x128xf32>, vector<8x128xf32> -> vector<8x128xf32>
    %18 = arith.addf %16, %17 : vector<8x128xf32>
    %19 = math.tanh %18 : vector<8x128xf32>
    %20 = arith.index_cast %c0_i32_14 : i32 to index
    %c0_18 = arith.constant 0 : index
    %c0_19 = arith.constant 0 : index
    %21 = vector.load %arg13[%20, %c0_18, %c0_19] : memref<8x8x128xf32, #tpu.memory_space<vmem>>, vector<1x8x128xf32>
    %22 = vector.shape_cast %21 : vector<1x8x128xf32> to vector<8x128xf32>
    %23 = vector.shape_cast %19 : vector<8x128xf32> to vector<1x8x128xf32>
    tpu.vector_store %arg13[%20, %c0_18, %c0_19], %23 {strides = array<i32>} : memref<8x8x128xf32, #tpu.memory_space<vmem>>, vector<1x8x128xf32>,
    %c1_i32 = arith.constant 1 : i32
    %24 = arith.index_cast %c1_i32 : i32 to index
    %c0_20 = arith.constant 0 : index
    %c0_21 = arith.constant 0 : index
    %25 = vector.load %arg12[%24, %c0_20, %c0_21] : memref<8x8x128xf32, #tpu.memory_space<vmem>>, vector<1x8x128xf32>
    %26 = vector.shape_cast %25 : vector<1x8x128xf32> to vector<8x128xf32>
    %cst_22 = arith.constant dense<0.000000e+00> : vector<8x128xf32>
    %27 = tpu.matmul %19, %12, %cst_22 {dimension_numbers = #tpu.dot_dimension_numbers<[1], [0], [0], [1], [0, 0, 1, 1], [], []>} : vector<8x128xf32>, vector<128x128xf32>, vector<8x128xf32> -> vector<8x128xf32>
    %28 = arith.addf %26, %27 : vector<8x128xf32>
    %29 = math.tanh %28 : vector<8x128xf32>
    %30 = arith.index_cast %c1_i32 : i32 to index
    %c0_23 = arith.constant 0 : index
    %c0_24 = arith.constant 0 : index
    %31 = vector.load %arg13[%30, %c0_23, %c0_24] : memref<8x8x128xf32, #tpu.memory_space<vmem>>, vector<1x8x128xf32>
    %32 = vector.shape_cast %31 : vector<1x8x128xf32> to vector<8x128xf32>
    %33 = vector.shape_cast %29 : vector<8x128xf32> to vector<1x8x128xf32>
    tpu.vector_store %arg13[%30, %c0_23, %c0_24], %33 {strides = array<i32>} : memref<8x8x128xf32, #tpu.memory_space<vmem>>, vector<1x8x128xf32>,
    %c2_i32 = arith.constant 2 : i32
    %34 = arith.index_cast %c2_i32 : i32 to index
    %c0_25 = arith.constant 0 : index
    %c0_26 = arith.constant 0 : index
    %35 = vector.load %arg12[%34, %c0_25, %c0_26] : memref<8x8x128xf32, #tpu.memory_space<vmem>>, vector<1x8x128xf32>
    %36 = vector.shape_cast %35 : vector<1x8x128xf32> to vector<8x128xf32>
    %cst_27 = arith.constant dense<0.000000e+00> : vector<8x128xf32>
    %37 = tpu.matmul %29, %12, %cst_27 {dimension_numbers = #tpu.dot_dimension_numbers<[1], [0], [0], [1], [0, 0, 1, 1], [], []>} : vector<8x128xf32>, vector<128x128xf32>, vector<8x128xf32> -> vector<8x128xf32>
    %38 = arith.addf %36, %37 : vector<8x128xf32>
    %39 = math.tanh %38 : vector<8x128xf32>
    %40 = arith.index_cast %c2_i32 : i32 to index
    %c0_28 = arith.constant 0 : index
    %c0_29 = arith.constant 0 : index
    %41 = vector.load %arg13[%40, %c0_28, %c0_29] : memref<8x8x128xf32, #tpu.memory_space<vmem>>, vector<1x8x128xf32>
    %42 = vector.shape_cast %41 : vector<1x8x128xf32> to vector<8x128xf32>
    %43 = vector.shape_cast %39 : vector<8x128xf32> to vector<1x8x128xf32>
    tpu.vector_store %arg13[%40, %c0_28, %c0_29], %43 {strides = array<i32>} : memref<8x8x128xf32, #tpu.memory_space<vmem>>, vector<1x8x128xf32>,
    %c3_i32 = arith.constant 3 : i32
    %44 = arith.index_cast %c3_i32 : i32 to index
    %c0_30 = arith.constant 0 : index
    %c0_31 = arith.constant 0 : index
    %45 = vector.load %arg12[%44, %c0_30, %c0_31] : memref<8x8x128xf32, #tpu.memory_space<vmem>>, vector<1x8x128xf32>
    %46 = vector.shape_cast %45 : vector<1x8x128xf32> to vector<8x128xf32>
    %cst_32 = arith.constant dense<0.000000e+00> : vector<8x128xf32>
    %47 = tpu.matmul %39, %12, %cst_32 {dimension_numbers = #tpu.dot_dimension_numbers<[1], [0], [0], [1], [0, 0, 1, 1], [], []>} : vector<8x128xf32>, vector<128x128xf32>, vector<8x128xf32> -> vector<8x128xf32>
    %48 = arith.addf %46, %47 : vector<8x128xf32>
    %49 = math.tanh %48 : vector<8x128xf32>
    %50 = arith.index_cast %c3_i32 : i32 to index
    %c0_33 = arith.constant 0 : index
    %c0_34 = arith.constant 0 : index
    %51 = vector.load %arg13[%50, %c0_33, %c0_34] : memref<8x8x128xf32, #tpu.memory_space<vmem>>, vector<1x8x128xf32>
    %52 = vector.shape_cast %51 : vector<1x8x128xf32> to vector<8x128xf32>
    %53 = vector.shape_cast %49 : vector<8x128xf32> to vector<1x8x128xf32>
    tpu.vector_store %arg13[%50, %c0_33, %c0_34], %53 {strides = array<i32>} : memref<8x8x128xf32, #tpu.memory_space<vmem>>, vector<1x8x128xf32>,
    %c4_i32 = arith.constant 4 : i32
    %54 = arith.index_cast %c4_i32 : i32 to index
    %c0_35 = arith.constant 0 : index
    %c0_36 = arith.constant 0 : index
    %55 = vector.load %arg12[%54, %c0_35, %c0_36] : memref<8x8x128xf32, #tpu.memory_space<vmem>>, vector<1x8x128xf32>
    %56 = vector.shape_cast %55 : vector<1x8x128xf32> to vector<8x128xf32>
    %cst_37 = arith.constant dense<0.000000e+00> : vector<8x128xf32>
    %57 = tpu.matmul %49, %12, %cst_37 {dimension_numbers = #tpu.dot_dimension_numbers<[1], [0], [0], [1], [0, 0, 1, 1], [], []>} : vector<8x128xf32>, vector<128x128xf32>, vector<8x128xf32> -> vector<8x128xf32>
    %58 = arith.addf %56, %57 : vector<8x128xf32>
    %59 = math.tanh %58 : vector<8x128xf32>
    %60 = arith.index_cast %c4_i32 : i32 to index
    %c0_38 = arith.constant 0 : index
    %c0_39 = arith.constant 0 : index
    %61 = vector.load %arg13[%60, %c0_38, %c0_39] : memref<8x8x128xf32, #tpu.memory_space<vmem>>, vector<1x8x128xf32>
    %62 = vector.shape_cast %61 : vector<1x8x128xf32> to vector<8x128xf32>
    %63 = vector.shape_cast %59 : vector<8x128xf32> to vector<1x8x128xf32>
    tpu.vector_store %arg13[%60, %c0_38, %c0_39], %63 {strides = array<i32>} : memref<8x8x128xf32, #tpu.memory_space<vmem>>, vector<1x8x128xf32>,
    %c5_i32 = arith.constant 5 : i32
    %64 = arith.index_cast %c5_i32 : i32 to index
    %c0_40 = arith.constant 0 : index
    %c0_41 = arith.constant 0 : index
    %65 = vector.load %arg12[%64, %c0_40, %c0_41] : memref<8x8x128xf32, #tpu.memory_space<vmem>>, vector<1x8x128xf32>
    %66 = vector.shape_cast %65 : vector<1x8x128xf32> to vector<8x128xf32>
    %cst_42 = arith.constant dense<0.000000e+00> : vector<8x128xf32>
    %67 = tpu.matmul %59, %12, %cst_42 {dimension_numbers = #tpu.dot_dimension_numbers<[1], [0], [0], [1], [0, 0, 1, 1], [], []>} : vector<8x128xf32>, vector<128x128xf32>, vector<8x128xf32> -> vector<8x128xf32>
    %68 = arith.addf %66, %67 : vector<8x128xf32>
    %69 = math.tanh %68 : vector<8x128xf32>
    %70 = arith.index_cast %c5_i32 : i32 to index
    %c0_43 = arith.constant 0 : index
    %c0_44 = arith.constant 0 : index
    %71 = vector.load %arg13[%70, %c0_43, %c0_44] : memref<8x8x128xf32, #tpu.memory_space<vmem>>, vector<1x8x128xf32>
    %72 = vector.shape_cast %71 : vector<1x8x128xf32> to vector<8x128xf32>
    %73 = vector.shape_cast %69 : vector<8x128xf32> to vector<1x8x128xf32>
    tpu.vector_store %arg13[%70, %c0_43, %c0_44], %73 {strides = array<i32>} : memref<8x8x128xf32, #tpu.memory_space<vmem>>, vector<1x8x128xf32>,
    %c6_i32 = arith.constant 6 : i32
    %74 = arith.index_cast %c6_i32 : i32 to index
    %c0_45 = arith.constant 0 : index
    %c0_46 = arith.constant 0 : index
    %75 = vector.load %arg12[%74, %c0_45, %c0_46] : memref<8x8x128xf32, #tpu.memory_space<vmem>>, vector<1x8x128xf32>
    %76 = vector.shape_cast %75 : vector<1x8x128xf32> to vector<8x128xf32>
    %cst_47 = arith.constant dense<0.000000e+00> : vector<8x128xf32>
    %77 = tpu.matmul %69, %12, %cst_47 {dimension_numbers = #tpu.dot_dimension_numbers<[1], [0], [0], [1], [0, 0, 1, 1], [], []>} : vector<8x128xf32>, vector<128x128xf32>, vector<8x128xf32> -> vector<8x128xf32>
    %78 = arith.addf %76, %77 : vector<8x128xf32>
    %79 = math.tanh %78 : vector<8x128xf32>
    %80 = arith.index_cast %c6_i32 : i32 to index
    %c0_48 = arith.constant 0 : index
    %c0_49 = arith.constant 0 : index
    %81 = vector.load %arg13[%80, %c0_48, %c0_49] : memref<8x8x128xf32, #tpu.memory_space<vmem>>, vector<1x8x128xf32>
    %82 = vector.shape_cast %81 : vector<1x8x128xf32> to vector<8x128xf32>
    %83 = vector.shape_cast %79 : vector<8x128xf32> to vector<1x8x128xf32>
    tpu.vector_store %arg13[%80, %c0_48, %c0_49], %83 {strides = array<i32>} : memref<8x8x128xf32, #tpu.memory_space<vmem>>, vector<1x8x128xf32>,
    %c7_i32 = arith.constant 7 : i32
    %84 = arith.index_cast %c7_i32 : i32 to index
    %c0_50 = arith.constant 0 : index
    %c0_51 = arith.constant 0 : index
    %85 = vector.load %arg12[%84, %c0_50, %c0_51] : memref<8x8x128xf32, #tpu.memory_space<vmem>>, vector<1x8x128xf32>
    %86 = vector.shape_cast %85 : vector<1x8x128xf32> to vector<8x128xf32>
    %cst_52 = arith.constant dense<0.000000e+00> : vector<8x128xf32>
    %87 = tpu.matmul %79, %12, %cst_52 {dimension_numbers = #tpu.dot_dimension_numbers<[1], [0], [0], [1], [0, 0, 1, 1], [], []>} : vector<8x128xf32>, vector<128x128xf32>, vector<8x128xf32> -> vector<8x128xf32>
    %88 = arith.addf %86, %87 : vector<8x128xf32>
    %89 = math.tanh %88 : vector<8x128xf32>
    %90 = arith.index_cast %c7_i32 : i32 to index
    %c0_53 = arith.constant 0 : index
    %c0_54 = arith.constant 0 : index
    %91 = vector.load %arg13[%90, %c0_53, %c0_54] : memref<8x8x128xf32, #tpu.memory_space<vmem>>, vector<1x8x128xf32>
    %92 = vector.shape_cast %91 : vector<1x8x128xf32> to vector<8x128xf32>
    %93 = vector.shape_cast %89 : vector<8x128xf32> to vector<1x8x128xf32>
    tpu.vector_store %arg13[%90, %c0_53, %c0_54], %93 {strides = array<i32>} : memref<8x8x128xf32, #tpu.memory_space<vmem>>, vector<1x8x128xf32>,
    %c8_i32 = arith.constant 8 : i32
    %c0_55 = arith.constant 0 : index
    %c0_56 = arith.constant 0 : index
    %94 = vector.load %arg11[%c0_55, %c0_56] : memref<8x128xf32, #tpu.memory_space<vmem>>, vector<8x128xf32>
    tpu.vector_store %arg11[%c0_55, %c0_56], %89 {strides = array<i32>} : memref<8x128xf32, #tpu.memory_space<vmem>>, vector<8x128xf32>,
    %c0_57 = arith.constant 0 : index
    %c0_58 = arith.constant 0 : index
    %c0_59 = arith.constant 0 : index
    %95 = vector.load %arg13[%c0_57, %c0_58, %c0_59] : memref<8x8x128xf32, #tpu.memory_space<vmem>>, vector<8x8x128xf32>
    %96 = vector.shape_cast %95 : vector<8x8x128xf32> to vector<64x128xf32>
    %c0_60 = arith.constant 0 : index
    %c0_61 = arith.constant 0 : index
    %97 = vector.load %arg7[%c0_60, %c0_61] : memref<1x16xf32, #tpu.memory_space<vmem>>, vector<1x16xf32>
    %c0_62 = arith.constant 0 : index
    %c0_63 = arith.constant 0 : index
    %98 = vector.load %arg6[%c0_62, %c0_63] : memref<128x16xf32, #tpu.memory_space<vmem>>, vector<128x16xf32>
    %cst_64 = arith.constant dense<0.000000e+00> : vector<64x16xf32>
    %99 = tpu.matmul %96, %98, %cst_64 {dimension_numbers = #tpu.dot_dimension_numbers<[1], [0], [0], [1], [0, 0, 1, 1], [], []>} : vector<64x128xf32>, vector<128x16xf32>, vector<64x16xf32> -> vector<64x16xf32>
    %100 = vector.broadcast %97 : vector<1x16xf32> to vector<64x16xf32>
    %101 = arith.addf %100, %99 : vector<64x16xf32>
    %102 = vector.shape_cast %101 : vector<64x16xf32> to vector<8x8x16xf32>
    %c0_65 = arith.constant 0 : index
    %c0_66 = arith.constant 0 : index
    %c0_67 = arith.constant 0 : index
    %103 = vector.load %arg9[%c0_65, %c0_66, %c0_67] : memref<8x8x16xf32, #tpu.memory_space<vmem>>, vector<8x8x16xf32>
    tpu.vector_store %arg9[%c0_65, %c0_66, %c0_67], %102 {strides = array<i32>} : memref<8x8x16xf32, #tpu.memory_space<vmem>>, vector<8x8x16xf32>,
    %c0_i32_68 = arith.constant 0 : i32
    %104 = arith.cmpi eq, %arg1, %c0_i32_68 : i32
    %105 = arith.extui %104 : i1 to i32
    %c0_i32_69 = arith.constant 0 : i32
    %106 = arith.cmpi ne, %105, %c0_i32_69 : i32
    scf.if %106 {
      %c0_70 = arith.constant 0 : index
      %c0_71 = arith.constant 0 : index
      %107 = vector.load %arg10[%c0_70, %c0_71] : memref<8x128xf32, #tpu.memory_space<vmem>>, vector<8x128xf32>
      tpu.vector_store %arg10[%c0_70, %c0_71], %89 {strides = array<i32>} : memref<8x128xf32, #tpu.memory_space<vmem>>, vector<8x128xf32>,
    } else {
    }
    return
  }
  func.func @transform_0(%arg0: i32, %arg1: i32) -> (i32, i32, i32) {
    %c0_i32 = arith.constant 0 : i32
    %c0_i32_0 = arith.constant 0 : i32
    return %arg1, %arg0, %c0_i32 : i32, i32, i32
  }
  func.func @transform_1(%arg0: i32, %arg1: i32) -> (i32, i32) {
    %c0_i32 = arith.constant 0 : i32
    %c0_i32_0 = arith.constant 0 : i32
    %c0_i32_1 = arith.constant 0 : i32
    return %c0_i32, %c0_i32_0 : i32, i32
  }
  func.func @transform_2(%arg0: i32, %arg1: i32) -> (i32, i32) {
    %c0_i32 = arith.constant 0 : i32
    %c0_i32_0 = arith.constant 0 : i32
    %c0_i32_1 = arith.constant 0 : i32
    return %c0_i32, %c0_i32_0 : i32, i32
  }
  func.func @transform_3(%arg0: i32, %arg1: i32) -> (i32, i32) {
    %c0_i32 = arith.constant 0 : i32
    %c0_i32_0 = arith.constant 0 : i32
    %c0_i32_1 = arith.constant 0 : i32
    return %c0_i32, %c0_i32_0 : i32, i32
  }
  func.func @transform_4(%arg0: i32, %arg1: i32) -> (i32, i32) {
    %c0_i32 = arith.constant 0 : i32
    %c0_i32_0 = arith.constant 0 : i32
    %c0_i32_1 = arith.constant 0 : i32
    return %c0_i32, %c0_i32_0 : i32, i32
  }
  func.func @transform_5(%arg0: i32, %arg1: i32) -> (i32, i32) {
    %c0_i32 = arith.constant 0 : i32
    %c0_i32_0 = arith.constant 0 : i32
    %c0_i32_1 = arith.constant 0 : i32
    return %c0_i32, %c0_i32_0 : i32, i32
  }
  func.func @transform_6(%arg0: i32, %arg1: i32) -> (i32, i32) {
    %c0_i32 = arith.constant 0 : i32
    %c0_i32_0 = arith.constant 0 : i32
    return %arg0, %c0_i32 : i32, i32
  }
  func.func @transform_7(%arg0: i32, %arg1: i32) -> (i32, i32, i32) {
    %c0_i32 = arith.constant 0 : i32
    %c0_i32_0 = arith.constant 0 : i32
    return %arg1, %arg0, %c0_i32 : i32, i32, i32
  }
  func.func @transform_8(%arg0: i32, %arg1: i32) -> (i32, i32) {
    %c0_i32 = arith.constant 0 : i32
    %c0_i32_0 = arith.constant 0 : i32
    return %arg0, %c0_i32 : i32, i32
  }
}

</mosaic_0001>

<llo_original>
// kernel: tpu_custom_call.1
$region0: #{tpu_custom_call.1}
  #allocation0 [shape = 'u32[]', space=smem, size = 0x4, offset = 0x4, fixed_abs, tag = 'smem constant byte address 0x4 - core index']
  #allocation1 [shape = 'u32[144,128]{1,0:T(1,128)}', space=vmem, size = 0x12000, scoped, tag = 'internal scratch']
  #allocation2 [shape = 'f32[8,128]{1,0:T(8,128)}', space=vmem, size = 0x1000, scoped, tag = 'scratch operand']
  #allocation3 [shape = 'f32[8,8,128]{2,1,0:T(8,128)}', space=vmem, size = 0x8000, scoped, tag = 'scratch operand']
  #allocation4 [shape = 'f32[8,8,128]{2,1,0:T(8,128)}', space=vmem, size = 0x8000, scoped, tag = 'scratch operand']
  %s0 = inlined_call_operand.vmem [shape: f32[8,8,4], index: 0, kind: input, shape index: {}]
  %s1 = inlined_call_operand.vmem [shape: f32[128,128], index: 1, kind: input, shape index: {}]
  %s2 = inlined_call_operand.vmem [shape: f32[4,128], index: 2, kind: input, shape index: {}]
  %s3 = inlined_call_operand.vmem [shape: f32[1,128], index: 3, kind: input, shape index: {}]
  %s4 = inlined_call_operand.vmem [shape: f32[128,16], index: 4, kind: input, shape index: {}]
  %s5 = inlined_call_operand.vmem [shape: f32[1,16], index: 5, kind: input, shape index: {}]
  %s6 = inlined_call_operand.vmem [shape: f32[8,128], index: 6, kind: input, shape index: {}]
  %s7 = inlined_call_operand.hbm [shape: f32[8,8,16], index: 7, kind: output, shape index: {0}]
  %s8 = inlined_call_operand.hbm [shape: f32[8,128], index: 8, kind: output, shape index: {1}]
  %9 = xla_tuple %s7, %s8
  %s10 = sld [smem:[#allocation0]]
  $region54: #{tpu_custom_call.1} parent=0
    _
  %s12 = ssub.s32 1, %s10
  %s13 = scalar_select 0, %s12, %s10
  $region1: #{tpu_custom_call.1} parent=0
    #allocation5 [shape = 'u8[32768]{0}', space=vmem, size = 0x8000, scoped, tag = 'output window, operand 0, single buffered']
    #allocation6 [shape = 's32[1]{0}', space=sflag, size = 0x4, scoped, tag = 'scoped memory for tpu_custom_call.1']
    #allocation7 [shape = 'u8[4096]{0}', space=vmem, size = 0x1000, scoped, tag = 'output window, operand 1, single buffered']
    #allocation8 [shape = 's32[1]{0}', space=sflag, size = 0x4, scoped, tag = 'scoped memory for tpu_custom_call.1']
    %14 = vsyncpa [#allocation6], 0
    %15 = vsyncpa [#allocation8], 0
    // Predicated region
    $region2: #{tpu_custom_call.1} parent=1 // pred_check
      _
    $region3: #{tpu_custom_call.1} parent=1 // pred_check_branch
      %17 = sbr.rel (0) target = $region5
    $region4: #{tpu_custom_call.1} parent=1 // pred_region
      _
    $region5: #{tpu_custom_call.1} parent=1 // pred_fallthru
      _
    // Predicated region
    $region6: #{tpu_custom_call.1} parent=1 // pred_check
      _
    $region7: #{tpu_custom_call.1} parent=1 // pred_check_branch
      %19 = sbr.rel (0) target = $region9
    $region8: #{tpu_custom_call.1} parent=1 // pred_region
      _
    $region9: #{tpu_custom_call.1} parent=1 // pred_fallthru
      _
    // Predicated region
    $region10: #{tpu_custom_call.1} parent=1 // pred_check
      _
    $region11: #{tpu_custom_call.1} parent=1 // pred_check_branch
      %21 = sbr.rel (0) target = $region13
    $region12: #{tpu_custom_call.1} parent=1 // pred_region
      _
    $region13: #{tpu_custom_call.1} parent=1 // pred_fallthru
      _
    // Predicated region
    $region14: #{tpu_custom_call.1} parent=1 // pred_check
      _
    $region15: #{tpu_custom_call.1} parent=1 // pred_check_branch
      %23 = sbr.rel (0) target = $region17
    $region16: #{tpu_custom_call.1} parent=1 // pred_region
      _
    $region17: #{tpu_custom_call.1} parent=1 // pred_fallthru
      _
    // Predicated region
    $region18: #{tpu_custom_call.1} parent=1 // pred_check
      _
    $region19: #{tpu_custom_call.1} parent=1 // pred_check_branch
      %25 = sbr.rel (0) target = $region21
    $region20: #{tpu_custom_call.1} parent=1 // pred_region
      _
    $region21: #{tpu_custom_call.1} parent=1 // pred_fallthru
      _
    // Predicated region
    $region22: #{tpu_custom_call.1} parent=1 // pred_check
      _
    $region23: #{tpu_custom_call.1} parent=1 // pred_check_branch
      %27 = sbr.rel (0) target = $region25
    $region24: #{tpu_custom_call.1} parent=1 // pred_region
      _
    $region25: #{tpu_custom_call.1} parent=1 // pred_fallthru
      _
    // Predicated region
    $region26: #{tpu_custom_call.1} parent=1 // pred_check
      _
    $region27: #{tpu_custom_call.1} parent=1 // pred_check_branch
      %29 = sbr.rel (0) target = $region29
    $region28: #{tpu_custom_call.1} parent=1 // pred_region
      _
    $region29: #{tpu_custom_call.1} parent=1 // pred_fallthru
      _
    %p30 = scmp.eq.s32.totalorder 0, 0
    // Predicated region
    $region30: #{tpu_custom_call.1} parent=1 // pred_check
      %p31 = pneg %p30
    $region31: #{tpu_custom_call.1} parent=1 // pred_check_branch
      %33 = sbr.rel (%p31) target = $region33
    $region32: #{tpu_custom_call.1} parent=1 // pred_region
      %v34 = vld [vmem:[%s6] sm:$0xff]
      %35 = vst [vmem:[#allocation2] sm:$0xff] %v34
    $region33: #{tpu_custom_call.1} parent=1 // pred_fallthru
      _
    %v36 = vld [vmem:[%s0] sm:$0xff]
    %v37 = vld [vmem:[%s0 + $0x8] sm:$0xff]
    %v38 = vld [vmem:[%s0 + $0x10] sm:$0xff]
    %v39 = vld [vmem:[%s0 + $0x18] sm:$0xff]
    %v40 = vld [vmem:[%s0 + $0x20] sm:$0xff]
    %v41 = vld [vmem:[%s0 + $0x28] sm:$0xff]
    %v42 = vld [vmem:[%s0 + $0x30] sm:$0xff]
    %v43 = vld [vmem:[%s0 + $0x38] sm:$0xff]
    %v44 = vld [vmem:[%s3] sm:$0x1]
    %v45 = vld [vmem:[%s2] sm:$0xf]
    %vm46 = vcmask 31744
    %v48 = vsel %vm46, %v36, 0
    %v51 = vsel %vm46, %v37, 0
    %v54 = vsel %vm46, %v38, 0
    %v57 = vsel %vm46, %v39, 0
    %v60 = vsel %vm46, %v40, 0
    %v63 = vsel %vm46, %v41, 0
    %v66 = vsel %vm46, %v42, 0
    %v69 = vsel %vm46, %v43, 0
    %vm71 = vcmask 1043456
    %v73 = vsel %vm71, %v45, 0
    %75 = vmatprep.subr.mxu0 0.0
    %76 = vmatpush1.msra.mxu0 %v73
    %77 = vmatprep.subr.mxu0 0.0
    %78 = vmatpush1.msra.mxu0 0.0
    %79 = vmatprep.subr.mxu0 0.0
    %80 = vmatpush1.msra.mxu0 0.0
    %81 = vmatprep.subr.mxu0 0.0
    %82 = vmatpush1.msra.mxu0 0.0
    %83 = vmatprep.subr.mxu0 0.0
    %84 = vmatpush1.msra.mxu0 0.0
    %85 = vmatprep.subr.mxu0 0.0
    %86 = vmatpush1.msra.mxu0 0.0
    %87 = vmatprep.subr.mxu0 0.0
    %88 = vmatpush1.msra.mxu0 0.0
    %89 = vmatprep.subr.mxu0 0.0
    %90 = vmatpush1.msra.mxu0 0.0
    %91 = vmatprep.subr.mxu0 0.0
    %92 = vmatpush1.msra.mxu0 0.0
    %93 = vmatprep.subr.mxu0 0.0
    %94 = vmatpush1.msra.mxu0 0.0
    %95 = vmatprep.subr.mxu0 0.0
    %96 = vmatpush1.msra.mxu0 0.0
    %97 = vmatprep.subr.mxu0 0.0
    %98 = vmatpush1.msra.mxu0 0.0
    %99 = vmatprep.subr.mxu0 0.0
    %100 = vmatpush1.msra.mxu0 0.0
    %101 = vmatprep.subr.mxu0 0.0
    %102 = vmatpush1.msra.mxu0 0.0
    %103 = vmatprep.subr.mxu0 0.0
    %104 = vmatpush1.msra.mxu0 0.0
    %105 = vmatprep.subr.mxu0 0.0
    %106 = vmatpush1.msra.mxu0 0.0
    %107 = vmatprep.subr.mxu0 0.0
    %108 = vmatpush1.msra.mxu0 0.0
    %109 = vmatprep.subr.mxu0 0.0
    %110 = vmatpush1.msra.mxu0 0.0
    %111 = vmatprep.subr.mxu0 0.0
    %112 = vmatpush1.msra.mxu0 0.0
    %113 = vmatprep.subr.mxu0 0.0
    %114 = vmatpush1.msra.mxu0 0.0
    %115 = vmatprep.subr.mxu0 0.0
    %116 = vmatpush1.msra.mxu0 0.0
    %117 = vmatprep.subr.mxu0 0.0
    %118 = vmatpush1.msra.mxu0 0.0
    %119 = vmatprep.subr.mxu0 0.0
    %120 = vmatpush1.msra.mxu0 0.0
    %121 = vmatprep.subr.mxu0 0.0
    %122 = vmatpush1.msra.mxu0 0.0
    %123 = vmatprep.subr.mxu0 0.0
    %124 = vmatpush1.msra.mxu0 0.0
    %125 = vmatprep.subr.mxu0 0.0
    %126 = vmatpush1.msra.mxu0 0.0
    %127 = vmatprep.subr.mxu0 0.0
    %128 = vmatpush1.msra.mxu0 0.0
    %129 = vmatprep.subr.mxu0 0.0
    %130 = vmatpush1.msra.mxu0 0.0
    %131 = vmatprep.subr.mxu0 0.0
    %132 = vmatpush1.msra.mxu0 0.0
    %133 = vmatprep.subr.mxu0 0.0
    %134 = vmatpush1.msra.mxu0 0.0
    %135 = vmatprep.subr.mxu0 0.0
    %136 = vmatpush1.msra.mxu0 0.0
    %137 = vmatprep.subr.mxu0 0.0
    %138 = vmatpush1.msra.mxu0 0.0
    %139 = vmatprep.mubr.f32.mxu0 0.0
    %140 = vmatmul.mubr.f32.gmra.mrb[0].mxu0 %v48
    %v141 = vpop.f32.mrb[0].mxu0
    %v142 = vadd.f32 0.0, %v141
    %v143 = vpop.f32.mrb[0].mxu0
    %144 = vmatprep.mubr.f32.mxu0 0.0
    %145 = vmatmul.mubr.f32.gmra.mrb[0].mxu0 %v51
    %v146 = vpop.f32.mrb[0].mxu0
    %v147 = vadd.f32 0.0, %v146
    %v148 = vpop.f32.mrb[0].mxu0
    %149 = vmatprep.mubr.f32.mxu0 0.0
    %150 = vmatmul.mubr.f32.gmra.mrb[0].mxu0 %v54
    %v151 = vpop.f32.mrb[0].mxu0
    %v152 = vadd.f32 0.0, %v151
    %v153 = vpop.f32.mrb[0].mxu0
    %154 = vmatprep.mubr.f32.mxu0 0.0
    %155 = vmatmul.mubr.f32.gmra.mrb[0].mxu0 %v57
    %v156 = vpop.f32.mrb[0].mxu0
    %v157 = vadd.f32 0.0, %v156
    %v158 = vpop.f32.mrb[0].mxu0
    %159 = vmatprep.mubr.f32.mxu0 0.0
    %160 = vmatmul.mubr.f32.gmra.mrb[0].mxu0 %v60
    %v161 = vpop.f32.mrb[0].mxu0
    %v162 = vadd.f32 0.0, %v161
    %v163 = vpop.f32.mrb[0].mxu0
    %164 = vmatprep.mubr.f32.mxu0 0.0
    %165 = vmatmul.mubr.f32.gmra.mrb[0].mxu0 %v63
    %v166 = vpop.f32.mrb[0].mxu0
    %v167 = vadd.f32 0.0, %v166
    %v168 = vpop.f32.mrb[0].mxu0
    %169 = vmatprep.mubr.f32.mxu0 0.0
    %170 = vmatmul.mubr.f32.gmra.mrb[0].mxu0 %v66
    %v171 = vpop.f32.mrb[0].mxu0
    %v172 = vadd.f32 0.0, %v171
    %v173 = vpop.f32.mrb[0].mxu0
    %174 = vmatprep.mubr.f32.mxu0 0.0
    %175 = vmatmul.mubr.f32.gmra.mrb[0].mxu0 %v69
    %v176 = vpop.f32.mrb[0].mxu0
    %v177 = vadd.f32 0.0, %v176
    %v178 = vpop.f32.mrb[0].mxu0
    %179 = vdwg.mxu0
    %v181 = vlaneseq
    %v182 = vshrl.u32 %v181, 7
    %v183 = vsub.s32 0, %v182
    %v184 = vrot.slane %v44, %v183
    %v186 = vadd.f32 %v184, %v142
    %v187 = vadd.f32 %v184, %v147
    %v188 = vadd.f32 %v184, %v152
    %v189 = vadd.f32 %v184, %v157
    %v190 = vadd.f32 %v184, %v162
    %v191 = vadd.f32 %v184, %v167
    %v192 = vadd.f32 %v184, %v172
    %v193 = vadd.f32 %v184, %v177
    %194 = vst [vmem:[#allocation3] sm:$0xff] %v186
    %195 = vst [vmem:[#allocation3 + $0x8] sm:$0xff] %v187
    %196 = vst [vmem:[#allocation3 + $0x10] sm:$0xff] %v188
    %197 = vst [vmem:[#allocation3 + $0x18] sm:$0xff] %v189
    %198 = vst [vmem:[#allocation3 + $0x20] sm:$0xff] %v190
    %199 = vst [vmem:[#allocation3 + $0x28] sm:$0xff] %v191
    %200 = vst [vmem:[#allocation3 + $0x30] sm:$0xff] %v192
    %201 = vst [vmem:[#allocation3 + $0x38] sm:$0xff] %v193
    %v202 = vld [vmem:[%s1] sm:$0xff]
    %v203 = vld [vmem:[%s1 + $0x8] sm:$0xff]
    %v204 = vld [vmem:[%s1 + $0x10] sm:$0xff]
    %v205 = vld [vmem:[%s1 + $0x18] sm:$0xff]
    %v206 = vld [vmem:[%s1 + $0x20] sm:$0xff]
    %v207 = vld [vmem:[%s1 + $0x28] sm:$0xff]
    %v208 = vld [vmem:[%s1 + $0x30] sm:$0xff]
    %v209 = vld [vmem:[%s1 + $0x38] sm:$0xff]
    %v210 = vld [vmem:[%s1 + $0x40] sm:$0xff]
    %v211 = vld [vmem:[%s1 + $0x48] sm:$0xff]
    %v212 = vld [vmem:[%s1 + $0x50] sm:$0xff]
    %v213 = vld [vmem:[%s1 + $0x58] sm:$0xff]
    %v214 = vld [vmem:[%s1 + $0x60] sm:$0xff]
    %v215 = vld [vmem:[%s1 + $0x68] sm:$0xff]
    %v216 = vld [vmem:[%s1 + $0x70] sm:$0xff]
    %v217 = vld [vmem:[%s1 + $0x78] sm:$0xff]
    %v218 = vld [vmem:[#allocation2] sm:$0xff]
    %v219 = vld [vmem:[#allocation3] sm:$0xff]
    %220 = vmatprep.subr.mxu0 0.0
    %221 = vmatpush1.msra.mxu0 %v202
    %222 = vmatprep.subr.mxu0 0.0
    %223 = vmatpush1.msra.mxu0 %v203
    %224 = vmatprep.subr.mxu0 0.0
    %225 = vmatpush1.msra.mxu0 %v204
    %226 = vmatprep.subr.mxu0 0.0
    %227 = vmatpush1.msra.mxu0 %v205
    %228 = vmatprep.subr.mxu0 0.0
    %229 = vmatpush1.msra.mxu0 %v206
    %230 = vmatprep.subr.mxu0 0.0
    %231 = vmatpush1.msra.mxu0 %v207
    %232 = vmatprep.subr.mxu0 0.0
    %233 = vmatpush1.msra.mxu0 %v208
    %234 = vmatprep.subr.mxu0 0.0
    %235 = vmatpush1.msra.mxu0 %v209
    %236 = vmatprep.subr.mxu0 0.0
    %237 = vmatpush1.msra.mxu0 %v210
    %238 = vmatprep.subr.mxu0 0.0
    %239 = vmatpush1.msra.mxu0 %v211
    %240 = vmatprep.subr.mxu0 0.0
    %241 = vmatpush1.msra.mxu0 %v212
    %242 = vmatprep.subr.mxu0 0.0
    %243 = vmatpush1.msra.mxu0 %v213
    %244 = vmatprep.subr.mxu0 0.0
    %245 = vmatpush1.msra.mxu0 %v214
    %246 = vmatprep.subr.mxu0 0.0
    %247 = vmatpush1.msra.mxu0 %v215
    %248 = vmatprep.subr.mxu0 0.0
    %249 = vmatpush1.msra.mxu0 %v216
    %250 = vmatprep.subr.mxu0 0.0
    %251 = vmatpush1.msra.mxu0 %v217
    %252 = vmatprep.subr.mxu0 0.0
    %253 = vmatpush1.msra.mxu0 0.0
    %254 = vmatprep.subr.mxu0 0.0
    %255 = vmatpush1.msra.mxu0 0.0
    %256 = vmatprep.subr.mxu0 0.0
    %257 = vmatpush1.msra.mxu0 0.0
    %258 = vmatprep.subr.mxu0 0.0
    %259 = vmatpush1.msra.mxu0 0.0
    %260 = vmatprep.subr.mxu0 0.0
    %261 = vmatpush1.msra.mxu0 0.0
    %262 = vmatprep.subr.mxu0 0.0
    %263 = vmatpush1.msra.mxu0 0.0
    %264 = vmatprep.subr.mxu0 0.0
    %265 = vmatpush1.msra.mxu0 0.0
    %266 = vmatprep.subr.mxu0 0.0
    %267 = vmatpush1.msra.mxu0 0.0
    %268 = vmatprep.subr.mxu0 0.0
    %269 = vmatpush1.msra.mxu0 0.0
    %270 = vmatprep.subr.mxu0 0.0
    %271 = vmatpush1.msra.mxu0 0.0
    %272 = vmatprep.subr.mxu0 0.0
    %273 = vmatpush1.msra.mxu0 0.0
    %274 = vmatprep.subr.mxu0 0.0
    %275 = vmatpush1.msra.mxu0 0.0
    %276 = vmatprep.subr.mxu0 0.0
    %277 = vmatpush1.msra.mxu0 0.0
    %278 = vmatprep.subr.mxu0 0.0
    %279 = vmatpush1.msra.mxu0 0.0
    %280 = vmatprep.subr.mxu0 0.0
    %281 = vmatpush1.msra.mxu0 0.0
    %282 = vmatprep.subr.mxu0 0.0
    %283 = vmatpush1.msra.mxu0 0.0
    %284 = vmatprep.mubr.f32.mxu0 0.0
    %285 = vmatmul.mubr.f32.gmra.mrb[0].mxu0 %v218
    %v286 = vpop.f32.mrb[0].mxu0
    %v287 = vadd.f32 0.0, %v286
    %v288 = vpop.f32.mrb[0].mxu0
    %289 = vdwg.mxu0
    %v290 = vadd.f32 %v219, %v287
    %v291 = vtanh.pop %v290
    %292 = vst [vmem:[#allocation4] sm:$0xff] %v291
    %s293 = scalar_lea.vmem [#allocation3], 8
    %v294 = vld [vmem:[%s293] sm:$0xff]
    %295 = vmatprep.subr.mxu0 0.0
    %296 = vmatpush1.msra.mxu0 %v202
    %297 = vmatprep.subr.mxu0 0.0
    %298 = vmatpush1.msra.mxu0 %v203
    %299 = vmatprep.subr.mxu0 0.0
    %300 = vmatpush1.msra.mxu0 %v204
    %301 = vmatprep.subr.mxu0 0.0
    %302 = vmatpush1.msra.mxu0 %v205
    %303 = vmatprep.subr.mxu0 0.0
    %304 = vmatpush1.msra.mxu0 %v206
    %305 = vmatprep.subr.mxu0 0.0
    %306 = vmatpush1.msra.mxu0 %v207
    %307 = vmatprep.subr.mxu0 0.0
    %308 = vmatpush1.msra.mxu0 %v208
    %309 = vmatprep.subr.mxu0 0.0
    %310 = vmatpush1.msra.mxu0 %v209
    %311 = vmatprep.subr.mxu0 0.0
    %312 = vmatpush1.msra.mxu0 %v210
    %313 = vmatprep.subr.mxu0 0.0
    %314 = vmatpush1.msra.mxu0 %v211
    %315 = vmatprep.subr.mxu0 0.0
    %316 = vmatpush1.msra.mxu0 %v212
    %317 = vmatprep.subr.mxu0 0.0
    %318 = vmatpush1.msra.mxu0 %v213
    %319 = vmatprep.subr.mxu0 0.0
    %320 = vmatpush1.msra.mxu0 %v214
    %321 = vmatprep.subr.mxu0 0.0
    %322 = vmatpush1.msra.mxu0 %v215
    %323 = vmatprep.subr.mxu0 0.0
    %324 = vmatpush1.msra.mxu0 %v216
    %325 = vmatprep.subr.mxu0 0.0
    %326 = vmatpush1.msra.mxu0 %v217
    %327 = vmatprep.subr.mxu0 0.0
    %328 = vmatpush1.msra.mxu0 0.0
    %329 = vmatprep.subr.mxu0 0.0
    %330 = vmatpush1.msra.mxu0 0.0
    %331 = vmatprep.subr.mxu0 0.0
    %332 = vmatpush1.msra.mxu0 0.0
    %333 = vmatprep.subr.mxu0 0.0
    %334 = vmatpush1.msra.mxu0 0.0
    %335 = vmatprep.subr.mxu0 0.0
    %336 = vmatpush1.msra.mxu0 0.0
    %337 = vmatprep.subr.mxu0 0.0
    %338 = vmatpush1.msra.mxu0 0.0
    %339 = vmatprep.subr.mxu0 0.0
    %340 = vmatpush1.msra.mxu0 0.0
    %341 = vmatprep.subr.mxu0 0.0
    %342 = vmatpush1.msra.mxu0 0.0
    %343 = vmatprep.subr.mxu0 0.0
    %344 = vmatpush1.msra.mxu0 0.0
    %345 = vmatprep.subr.mxu0 0.0
    %346 = vmatpush1.msra.mxu0 0.0
    %347 = vmatprep.subr.mxu0 0.0
    %348 = vmatpush1.msra.mxu0 0.0
    %349 = vmatprep.subr.mxu0 0.0
    %350 = vmatpush1.msra.mxu0 0.0
    %351 = vmatprep.subr.mxu0 0.0
    %352 = vmatpush1.msra.mxu0 0.0
    %353 = vmatprep.subr.mxu0 0.0
    %354 = vmatpush1.msra.mxu0 0.0
    %355 = vmatprep.subr.mxu0 0.0
    %356 = vmatpush1.msra.mxu0 0.0
    %357 = vmatprep.subr.mxu0 0.0
    %358 = vmatpush1.msra.mxu0 0.0
    %359 = vmatprep.mubr.f32.mxu0 0.0
    %360 = vmatmul.mubr.f32.gmra.mrb[0].mxu0 %v291
    %v361 = vpop.f32.mrb[0].mxu0
    %v362 = vadd.f32 0.0, %v361
    %v363 = vpop.f32.mrb[0].mxu0
    %364 = vdwg.mxu0
    %v365 = vadd.f32 %v294, %v362
    %v366 = vtanh.pop %v365
    %s367 = scalar_lea.vmem [#allocation4], 8
    %368 = vst [vmem:[%s367] sm:$0xff] %v366
    %s369 = scalar_lea.vmem [#allocation3], 16
    %v370 = vld [vmem:[%s369] sm:$0xff]
    %371 = vmatprep.subr.mxu0 0.0
    %372 = vmatpush1.msra.mxu0 %v202
    %373 = vmatprep.subr.mxu0 0.0
    %374 = vmatpush1.msra.mxu0 %v203
    %375 = vmatprep.subr.mxu0 0.0
    %376 = vmatpush1.msra.mxu0 %v204
    %377 = vmatprep.subr.mxu0 0.0
    %378 = vmatpush1.msra.mxu0 %v205
    %379 = vmatprep.subr.mxu0 0.0
    %380 = vmatpush1.msra.mxu0 %v206
    %381 = vmatprep.subr.mxu0 0.0
    %382 = vmatpush1.msra.mxu0 %v207
    %383 = vmatprep.subr.mxu0 0.0
    %384 = vmatpush1.msra.mxu0 %v208
    %385 = vmatprep.subr.mxu0 0.0
    %386 = vmatpush1.msra.mxu0 %v209
    %387 = vmatprep.subr.mxu0 0.0
    %388 = vmatpush1.msra.mxu0 %v210
    %389 = vmatprep.subr.mxu0 0.0
    %390 = vmatpush1.msra.mxu0 %v211
    %391 = vmatprep.subr.mxu0 0.0
    %392 = vmatpush1.msra.mxu0 %v212
    %393 = vmatprep.subr.mxu0 0.0
    %394 = vmatpush1.msra.mxu0 %v213
    %395 = vmatprep.subr.mxu0 0.0
    %396 = vmatpush1.msra.mxu0 %v214
    %397 = vmatprep.subr.mxu0 0.0
    %398 = vmatpush1.msra.mxu0 %v215
    %399 = vmatprep.subr.mxu0 0.0
    %400 = vmatpush1.msra.mxu0 %v216
    %401 = vmatprep.subr.mxu0 0.0
    %402 = vmatpush1.msra.mxu0 %v217
    %403 = vmatprep.subr.mxu0 0.0
    %404 = vmatpush1.msra.mxu0 0.0
    %405 = vmatprep.subr.mxu0 0.0
    %406 = vmatpush1.msra.mxu0 0.0
    %407 = vmatprep.subr.mxu0 0.0
    %408 = vmatpush1.msra.mxu0 0.0
    %409 = vmatprep.subr.mxu0 0.0
    %410 = vmatpush1.msra.mxu0 0.0
    %411 = vmatprep.subr.mxu0 0.0
    %412 = vmatpush1.msra.mxu0 0.0
    %413 = vmatprep.subr.mxu0 0.0
    %414 = vmatpush1.msra.mxu0 0.0
    %415 = vmatprep.subr.mxu0 0.0
    %416 = vmatpush1.msra.mxu0 0.0
    %417 = vmatprep.subr.mxu0 0.0
    %418 = vmatpush1.msra.mxu0 0.0
    %419 = vmatprep.subr.mxu0 0.0
    %420 = vmatpush1.msra.mxu0 0.0
    %421 = vmatprep.subr.mxu0 0.0
    %422 = vmatpush1.msra.mxu0 0.0
    %423 = vmatprep.subr.mxu0 0.0
    %424 = vmatpush1.msra.mxu0 0.0
    %425 = vmatprep.subr.mxu0 0.0
    %426 = vmatpush1.msra.mxu0 0.0
    %427 = vmatprep.subr.mxu0 0.0
    %428 = vmatpush1.msra.mxu0 0.0
    %429 = vmatprep.subr.mxu0 0.0
    %430 = vmatpush1.msra.mxu0 0.0
    %431 = vmatprep.subr.mxu0 0.0
    %432 = vmatpush1.msra.mxu0 0.0
    %433 = vmatprep.subr.mxu0 0.0
    %434 = vmatpush1.msra.mxu0 0.0
    %435 = vmatprep.mubr.f32.mxu0 0.0
    %436 = vmatmul.mubr.f32.gmra.mrb[0].mxu0 %v366
    %v437 = vpop.f32.mrb[0].mxu0
    %v438 = vadd.f32 0.0, %v437
    %v439 = vpop.f32.mrb[0].mxu0
    %440 = vdwg.mxu0
    %v441 = vadd.f32 %v370, %v438
    %v442 = vtanh.pop %v441
    %s443 = scalar_lea.vmem [#allocation4], 16
    %444 = vst [vmem:[%s443] sm:$0xff] %v442
    %s445 = scalar_lea.vmem [#allocation3], 24
    %v446 = vld [vmem:[%s445] sm:$0xff]
    %447 = vmatprep.subr.mxu0 0.0
    %448 = vmatpush1.msra.mxu0 %v202
    %449 = vmatprep.subr.mxu0 0.0
    %450 = vmatpush1.msra.mxu0 %v203
    %451 = vmatprep.subr.mxu0 0.0
    %452 = vmatpush1.msra.mxu0 %v204
    %453 = vmatprep.subr.mxu0 0.0
    %454 = vmatpush1.msra.mxu0 %v205
    %455 = vmatprep.subr.mxu0 0.0
    %456 = vmatpush1.msra.mxu0 %v206
    %457 = vmatprep.subr.mxu0 0.0
    %458 = vmatpush1.msra.mxu0 %v207
    %459 = vmatprep.subr.mxu0 0.0
    %460 = vmatpush1.msra.mxu0 %v208
    %461 = vmatprep.subr.mxu0 0.0
    %462 = vmatpush1.msra.mxu0 %v209
    %463 = vmatprep.subr.mxu0 0.0
    %464 = vmatpush1.msra.mxu0 %v210
    %465 = vmatprep.subr.mxu0 0.0
    %466 = vmatpush1.msra.mxu0 %v211
    %467 = vmatprep.subr.mxu0 0.0
    %468 = vmatpush1.msra.mxu0 %v212
    %469 = vmatprep.subr.mxu0 0.0
    %470 = vmatpush1.msra.mxu0 %v213
    %471 = vmatprep.subr.mxu0 0.0
    %472 = vmatpush1.msra.mxu0 %v214
    %473 = vmatprep.subr.mxu0 0.0
    %474 = vmatpush1.msra.mxu0 %v215
    %475 = vmatprep.subr.mxu0 0.0
    %476 = vmatpush1.msra.mxu0 %v216
    %477 = vmatprep.subr.mxu0 0.0
    %478 = vmatpush1.msra.mxu0 %v217
    %479 = vmatprep.subr.mxu0 0.0
    %480 = vmatpush1.msra.mxu0 0.0
    %481 = vmatprep.subr.mxu0 0.0
    %482 = vmatpush1.msra.mxu0 0.0
    %483 = vmatprep.subr.mxu0 0.0
    %484 = vmatpush1.msra.mxu0 0.0
    %485 = vmatprep.subr.mxu0 0.0
    %486 = vmatpush1.msra.mxu0 0.0
    %487 = vmatprep.subr.mxu0 0.0
    %488 = vmatpush1.msra.mxu0 0.0
    %489 = vmatprep.subr.mxu0 0.0
    %490 = vmatpush1.msra.mxu0 0.0
    %491 = vmatprep.subr.mxu0 0.0
    %492 = vmatpush1.msra.mxu0 0.0
    %493 = vmatprep.subr.mxu0 0.0
    %494 = vmatpush1.msra.mxu0 0.0
    %495 = vmatprep.subr.mxu0 0.0
    %496 = vmatpush1.msra.mxu0 0.0
    %497 = vmatprep.subr.mxu0 0.0
    %498 = vmatpush1.msra.mxu0 0.0
    %499 = vmatprep.subr.mxu0 0.0
    %500 = vmatpush1.msra.mxu0 0.0
    %501 = vmatprep.subr.mxu0 0.0
    %502 = vmatpush1.msra.mxu0 0.0
    %503 = vmatprep.subr.mxu0 0.0
    %504 = vmatpush1.msra.mxu0 0.0
    %505 = vmatprep.subr.mxu0 0.0
    %506 = vmatpush1.msra.mxu0 0.0
    %507 = vmatprep.subr.mxu0 0.0
    %508 = vmatpush1.msra.mxu0 0.0
    %509 = vmatprep.subr.mxu0 0.0
    %510 = vmatpush1.msra.mxu0 0.0
    %511 = vmatprep.mubr.f32.mxu0 0.0
    %512 = vmatmul.mubr.f32.gmra.mrb[0].mxu0 %v442
    %v513 = vpop.f32.mrb[0].mxu0
    %v514 = vadd.f32 0.0, %v513
    %v515 = vpop.f32.mrb[0].mxu0
    %516 = vdwg.mxu0
    %v517 = vadd.f32 %v446, %v514
    %v518 = vtanh.pop %v517
    %s519 = scalar_lea.vmem [#allocation4], 24
    %520 = vst [vmem:[%s519] sm:$0xff] %v518
    %s521 = scalar_lea.vmem [#allocation3], 32
    %v522 = vld [vmem:[%s521] sm:$0xff]
    %523 = vmatprep.subr.mxu0 0.0
    %524 = vmatpush1.msra.mxu0 %v202
    %525 = vmatprep.subr.mxu0 0.0
    %526 = vmatpush1.msra.mxu0 %v203
    %527 = vmatprep.subr.mxu0 0.0
    %528 = vmatpush1.msra.mxu0 %v204
    %529 = vmatprep.subr.mxu0 0.0
    %530 = vmatpush1.msra.mxu0 %v205
    %531 = vmatprep.subr.mxu0 0.0
    %532 = vmatpush1.msra.mxu0 %v206
    %533 = vmatprep.subr.mxu0 0.0
    %534 = vmatpush1.msra.mxu0 %v207
    %535 = vmatprep.subr.mxu0 0.0
    %536 = vmatpush1.msra.mxu0 %v208
    %537 = vmatprep.subr.mxu0 0.0
    %538 = vmatpush1.msra.mxu0 %v209
    %539 = vmatprep.subr.mxu0 0.0
    %540 = vmatpush1.msra.mxu0 %v210
    %541 = vmatprep.subr.mxu0 0.0
    %542 = vmatpush1.msra.mxu0 %v211
    %543 = vmatprep.subr.mxu0 0.0
    %544 = vmatpush1.msra.mxu0 %v212
    %545 = vmatprep.subr.mxu0 0.0
    %546 = vmatpush1.msra.mxu0 %v213
    %547 = vmatprep.subr.mxu0 0.0
    %548 = vmatpush1.msra.mxu0 %v214
    %549 = vmatprep.subr.mxu0 0.0
    %550 = vmatpush1.msra.mxu0 %v215
    %551 = vmatprep.subr.mxu0 0.0
    %552 = vmatpush1.msra.mxu0 %v216
    %553 = vmatprep.subr.mxu0 0.0
    %554 = vmatpush1.msra.mxu0 %v217
    %555 = vmatprep.subr.mxu0 0.0
    %556 = vmatpush1.msra.mxu0 0.0
    %557 = vmatprep.subr.mxu0 0.0
    %558 = vmatpush1.msra.mxu0 0.0
    %559 = vmatprep.subr.mxu0 0.0
    %560 = vmatpush1.msra.mxu0 0.0
    %561 = vmatprep.subr.mxu0 0.0
    %562 = vmatpush1.msra.mxu0 0.0
    %563 = vmatprep.subr.mxu0 0.0
    %564 = vmatpush1.msra.mxu0 0.0
    %565 = vmatprep.subr.mxu0 0.0
    %566 = vmatpush1.msra.mxu0 0.0
    %567 = vmatprep.subr.mxu0 0.0
    %568 = vmatpush1.msra.mxu0 0.0
    %569 = vmatprep.subr.mxu0 0.0
    %570 = vmatpush1.msra.mxu0 0.0
    %571 = vmatprep.subr.mxu0 0.0
    %572 = vmatpush1.msra.mxu0 0.0
    %573 = vmatprep.subr.mxu0 0.0
    %574 = vmatpush1.msra.mxu0 0.0
    %575 = vmatprep.subr.mxu0 0.0
    %576 = vmatpush1.msra.mxu0 0.0
    %577 = vmatprep.subr.mxu0 0.0
    %578 = vmatpush1.msra.mxu0 0.0
    %579 = vmatprep.subr.mxu0 0.0
    %580 = vmatpush1.msra.mxu0 0.0
    %581 = vmatprep.subr.mxu0 0.0
    %582 = vmatpush1.msra.mxu0 0.0
    %583 = vmatprep.subr.mxu0 0.0
    %584 = vmatpush1.msra.mxu0 0.0
    %585 = vmatprep.subr.mxu0 0.0
    %586 = vmatpush1.msra.mxu0 0.0
    %587 = vmatprep.mubr.f32.mxu0 0.0
    %588 = vmatmul.mubr.f32.gmra.mrb[0].mxu0 %v518
    %v589 = vpop.f32.mrb[0].mxu0
    %v590 = vadd.f32 0.0, %v589
    %v591 = vpop.f32.mrb[0].mxu0
    %592 = vdwg.mxu0
    %v593 = vadd.f32 %v522, %v590
    %v594 = vtanh.pop %v593
    %s595 = scalar_lea.vmem [#allocation4], 32
    %596 = vst [vmem:[%s595] sm:$0xff] %v594
    %s597 = scalar_lea.vmem [#allocation3], 40
    %v598 = vld [vmem:[%s597] sm:$0xff]
    %599 = vmatprep.subr.mxu0 0.0
    %600 = vmatpush1.msra.mxu0 %v202
    %601 = vmatprep.subr.mxu0 0.0
    %602 = vmatpush1.msra.mxu0 %v203
    %603 = vmatprep.subr.mxu0 0.0
    %604 = vmatpush1.msra.mxu0 %v204
    %605 = vmatprep.subr.mxu0 0.0
    %606 = vmatpush1.msra.mxu0 %v205
    %607 = vmatprep.subr.mxu0 0.0
    %608 = vmatpush1.msra.mxu0 %v206
    %609 = vmatprep.subr.mxu0 0.0
    %610 = vmatpush1.msra.mxu0 %v207
    %611 = vmatprep.subr.mxu0 0.0
    %612 = vmatpush1.msra.mxu0 %v208
    %613 = vmatprep.subr.mxu0 0.0
    %614 = vmatpush1.msra.mxu0 %v209
    %615 = vmatprep.subr.mxu0 0.0
    %616 = vmatpush1.msra.mxu0 %v210
    %617 = vmatprep.subr.mxu0 0.0
    %618 = vmatpush1.msra.mxu0 %v211
    %619 = vmatprep.subr.mxu0 0.0
    %620 = vmatpush1.msra.mxu0 %v212
    %621 = vmatprep.subr.mxu0 0.0
    %622 = vmatpush1.msra.mxu0 %v213
    %623 = vmatprep.subr.mxu0 0.0
    %624 = vmatpush1.msra.mxu0 %v214
    %625 = vmatprep.subr.mxu0 0.0
    %626 = vmatpush1.msra.mxu0 %v215
    %627 = vmatprep.subr.mxu0 0.0
    %628 = vmatpush1.msra.mxu0 %v216
    %629 = vmatprep.subr.mxu0 0.0
    %630 = vmatpush1.msra.mxu0 %v217
    %631 = vmatprep.subr.mxu0 0.0
    %632 = vmatpush1.msra.mxu0 0.0
    %633 = vmatprep.subr.mxu0 0.0
    %634 = vmatpush1.msra.mxu0 0.0
    %635 = vmatprep.subr.mxu0 0.0
    %636 = vmatpush1.msra.mxu0 0.0
    %637 = vmatprep.subr.mxu0 0.0
    %638 = vmatpush1.msra.mxu0 0.0
    %639 = vmatprep.subr.mxu0 0.0
    %640 = vmatpush1.msra.mxu0 0.0
    %641 = vmatprep.subr.mxu0 0.0
    %642 = vmatpush1.msra.mxu0 0.0
    %643 = vmatprep.subr.mxu0 0.0
    %644 = vmatpush1.msra.mxu0 0.0
    %645 = vmatprep.subr.mxu0 0.0
    %646 = vmatpush1.msra.mxu0 0.0
    %647 = vmatprep.subr.mxu0 0.0
    %648 = vmatpush1.msra.mxu0 0.0
    %649 = vmatprep.subr.mxu0 0.0
    %650 = vmatpush1.msra.mxu0 0.0
    %651 = vmatprep.subr.mxu0 0.0
    %652 = vmatpush1.msra.mxu0 0.0
    %653 = vmatprep.subr.mxu0 0.0
    %654 = vmatpush1.msra.mxu0 0.0
    %655 = vmatprep.subr.mxu0 0.0
    %656 = vmatpush1.msra.mxu0 0.0
    %657 = vmatprep.subr.mxu0 0.0
    %658 = vmatpush1.msra.mxu0 0.0
    %659 = vmatprep.subr.mxu0 0.0
    %660 = vmatpush1.msra.mxu0 0.0
    %661 = vmatprep.subr.mxu0 0.0
    %662 = vmatpush1.msra.mxu0 0.0
    %663 = vmatprep.mubr.f32.mxu0 0.0
    %664 = vmatmul.mubr.f32.gmra.mrb[0].mxu0 %v594
    %v665 = vpop.f32.mrb[0].mxu0
    %v666 = vadd.f32 0.0, %v665
    %v667 = vpop.f32.mrb[0].mxu0
    %668 = vdwg.mxu0
    %v669 = vadd.f32 %v598, %v666
    %v670 = vtanh.pop %v669
    %s671 = scalar_lea.vmem [#allocation4], 40
    %672 = vst [vmem:[%s671] sm:$0xff] %v670
    %s673 = scalar_lea.vmem [#allocation3], 48
    %v674 = vld [vmem:[%s673] sm:$0xff]
    %675 = vmatprep.subr.mxu0 0.0
    %676 = vmatpush1.msra.mxu0 %v202
    %677 = vmatprep.subr.mxu0 0.0
    %678 = vmatpush1.msra.mxu0 %v203
    %679 = vmatprep.subr.mxu0 0.0
    %680 = vmatpush1.msra.mxu0 %v204
    %681 = vmatprep.subr.mxu0 0.0
    %682 = vmatpush1.msra.mxu0 %v205
    %683 = vmatprep.subr.mxu0 0.0
    %684 = vmatpush1.msra.mxu0 %v206
    %685 = vmatprep.subr.mxu0 0.0
    %686 = vmatpush1.msra.mxu0 %v207
    %687 = vmatprep.subr.mxu0 0.0
    %688 = vmatpush1.msra.mxu0 %v208
    %689 = vmatprep.subr.mxu0 0.0
    %690 = vmatpush1.msra.mxu0 %v209
    %691 = vmatprep.subr.mxu0 0.0
    %692 = vmatpush1.msra.mxu0 %v210
    %693 = vmatprep.subr.mxu0 0.0
    %694 = vmatpush1.msra.mxu0 %v211
    %695 = vmatprep.subr.mxu0 0.0
    %696 = vmatpush1.msra.mxu0 %v212
    %697 = vmatprep.subr.mxu0 0.0
    %698 = vmatpush1.msra.mxu0 %v213
    %699 = vmatprep.subr.mxu0 0.0
    %700 = vmatpush1.msra.mxu0 %v214
    %701 = vmatprep.subr.mxu0 0.0
    %702 = vmatpush1.msra.mxu0 %v215
    %703 = vmatprep.subr.mxu0 0.0
    %704 = vmatpush1.msra.mxu0 %v216
    %705 = vmatprep.subr.mxu0 0.0
    %706 = vmatpush1.msra.mxu0 %v217
    %707 = vmatprep.subr.mxu0 0.0
    %708 = vmatpush1.msra.mxu0 0.0
    %709 = vmatprep.subr.mxu0 0.0
    %710 = vmatpush1.msra.mxu0 0.0
    %711 = vmatprep.subr.mxu0 0.0
    %712 = vmatpush1.msra.mxu0 0.0
    %713 = vmatprep.subr.mxu0 0.0
    %714 = vmatpush1.msra.mxu0 0.0
    %715 = vmatprep.subr.mxu0 0.0
    %716 = vmatpush1.msra.mxu0 0.0
    %717 = vmatprep.subr.mxu0 0.0
    %718 = vmatpush1.msra.mxu0 0.0
    %719 = vmatprep.subr.mxu0 0.0
    %720 = vmatpush1.msra.mxu0 0.0
    %721 = vmatprep.subr.mxu0 0.0
    %722 = vmatpush1.msra.mxu0 0.0
    %723 = vmatprep.subr.mxu0 0.0
    %724 = vmatpush1.msra.mxu0 0.0
    %725 = vmatprep.subr.mxu0 0.0
    %726 = vmatpush1.msra.mxu0 0.0
    %727 = vmatprep.subr.mxu0 0.0
    %728 = vmatpush1.msra.mxu0 0.0
    %729 = vmatprep.subr.mxu0 0.0
    %730 = vmatpush1.msra.mxu0 0.0
    %731 = vmatprep.subr.mxu0 0.0
    %732 = vmatpush1.msra.mxu0 0.0
    %733 = vmatprep.subr.mxu0 0.0
    %734 = vmatpush1.msra.mxu0 0.0
    %735 = vmatprep.subr.mxu0 0.0
    %736 = vmatpush1.msra.mxu0 0.0
    %737 = vmatprep.subr.mxu0 0.0
    %738 = vmatpush1.msra.mxu0 0.0
    %739 = vmatprep.mubr.f32.mxu0 0.0
    %740 = vmatmul.mubr.f32.gmra.mrb[0].mxu0 %v670
    %v741 = vpop.f32.mrb[0].mxu0
    %v742 = vadd.f32 0.0, %v741
    %v743 = vpop.f32.mrb[0].mxu0
    %744 = vdwg.mxu0
    %v745 = vadd.f32 %v674, %v742
    %v746 = vtanh.pop %v745
    %s747 = scalar_lea.vmem [#allocation4], 48
    %748 = vst [vmem:[%s747] sm:$0xff] %v746
    %s749 = scalar_lea.vmem [#allocation3], 56
    %v750 = vld [vmem:[%s749] sm:$0xff]
    %751 = vmatprep.subr.mxu0 0.0
    %752 = vmatpush1.msra.mxu0 %v202
    %753 = vmatprep.subr.mxu0 0.0
    %754 = vmatpush1.msra.mxu0 %v203
    %755 = vmatprep.subr.mxu0 0.0
    %756 = vmatpush1.msra.mxu0 %v204
    %757 = vmatprep.subr.mxu0 0.0
    %758 = vmatpush1.msra.mxu0 %v205
    %759 = vmatprep.subr.mxu0 0.0
    %760 = vmatpush1.msra.mxu0 %v206
    %761 = vmatprep.subr.mxu0 0.0
    %762 = vmatpush1.msra.mxu0 %v207
    %763 = vmatprep.subr.mxu0 0.0
    %764 = vmatpush1.msra.mxu0 %v208
    %765 = vmatprep.subr.mxu0 0.0
    %766 = vmatpush1.msra.mxu0 %v209
    %767 = vmatprep.subr.mxu0 0.0
    %768 = vmatpush1.msra.mxu0 %v210
    %769 = vmatprep.subr.mxu0 0.0
    %770 = vmatpush1.msra.mxu0 %v211
    %771 = vmatprep.subr.mxu0 0.0
    %772 = vmatpush1.msra.mxu0 %v212
    %773 = vmatprep.subr.mxu0 0.0
    %774 = vmatpush1.msra.mxu0 %v213
    %775 = vmatprep.subr.mxu0 0.0
    %776 = vmatpush1.msra.mxu0 %v214
    %777 = vmatprep.subr.mxu0 0.0
    %778 = vmatpush1.msra.mxu0 %v215
    %779 = vmatprep.subr.mxu0 0.0
    %780 = vmatpush1.msra.mxu0 %v216
    %781 = vmatprep.subr.mxu0 0.0
    %782 = vmatpush1.msra.mxu0 %v217
    %783 = vmatprep.subr.mxu0 0.0
    %784 = vmatpush1.msra.mxu0 0.0
    %785 = vmatprep.subr.mxu0 0.0
    %786 = vmatpush1.msra.mxu0 0.0
    %787 = vmatprep.subr.mxu0 0.0
    %788 = vmatpush1.msra.mxu0 0.0
    %789 = vmatprep.subr.mxu0 0.0
    %790 = vmatpush1.msra.mxu0 0.0
    %791 = vmatprep.subr.mxu0 0.0
    %792 = vmatpush1.msra.mxu0 0.0
    %793 = vmatprep.subr.mxu0 0.0
    %794 = vmatpush1.msra.mxu0 0.0
    %795 = vmatprep.subr.mxu0 0.0
    %796 = vmatpush1.msra.mxu0 0.0
    %797 = vmatprep.subr.mxu0 0.0
    %798 = vmatpush1.msra.mxu0 0.0
    %799 = vmatprep.subr.mxu0 0.0
    %800 = vmatpush1.msra.mxu0 0.0
    %801 = vmatprep.subr.mxu0 0.0
    %802 = vmatpush1.msra.mxu0 0.0
    %803 = vmatprep.subr.mxu0 0.0
    %804 = vmatpush1.msra.mxu0 0.0
    %805 = vmatprep.subr.mxu0 0.0
    %806 = vmatpush1.msra.mxu0 0.0
    %807 = vmatprep.subr.mxu0 0.0
    %808 = vmatpush1.msra.mxu0 0.0
    %809 = vmatprep.subr.mxu0 0.0
    %810 = vmatpush1.msra.mxu0 0.0
    %811 = vmatprep.subr.mxu0 0.0
    %812 = vmatpush1.msra.mxu0 0.0
    %813 = vmatprep.subr.mxu0 0.0
    %814 = vmatpush1.msra.mxu0 0.0
    %815 = vmatprep.mubr.f32.mxu0 0.0
    %816 = vmatmul.mubr.f32.gmra.mrb[0].mxu0 %v746
    %v817 = vpop.f32.mrb[0].mxu0
    %v818 = vadd.f32 0.0, %v817
    %v819 = vpop.f32.mrb[0].mxu0
    %820 = vdwg.mxu0
    %v821 = vadd.f32 %v750, %v818
    %v822 = vtanh.pop %v821
    %s823 = scalar_lea.vmem [#allocation4], 56
    %824 = vst [vmem:[%s823] sm:$0xff] %v822
    %825 = vst [vmem:[#allocation2] sm:$0xff] %v822
    %v826 = vld [vmem:[#allocation4] sm:$0xff]
    %v827 = vld [vmem:[#allocation4 + $0x8] sm:$0xff]
    %v828 = vld [vmem:[#allocation4 + $0x10] sm:$0xff]
    %v829 = vld [vmem:[#allocation4 + $0x18] sm:$0xff]
    %v830 = vld [vmem:[#allocation4 + $0x20] sm:$0xff]
    %v831 = vld [vmem:[#allocation4 + $0x28] sm:$0xff]
    %v832 = vld [vmem:[#allocation4 + $0x30] sm:$0xff]
    %v833 = vld [vmem:[#allocation4 + $0x38] sm:$0xff]
    %v834 = vld [vmem:[%s5] sm:$0x1]
    %v835 = vld [vmem:[%s4] sm:$0xff]
    %v836 = vld [vmem:[%s4 + $0x8] sm:$0xff]
    %v837 = vld [vmem:[%s4 + $0x10] sm:$0xff]
    %v838 = vld [vmem:[%s4 + $0x18] sm:$0xff]
    %v839 = vld [vmem:[%s4 + $0x20] sm:$0xff]
    %v840 = vld [vmem:[%s4 + $0x28] sm:$0xff]
    %v841 = vld [vmem:[%s4 + $0x30] sm:$0xff]
    %v842 = vld [vmem:[%s4 + $0x38] sm:$0xff]
    %v843 = vld [vmem:[%s4 + $0x40] sm:$0xff]
    %v844 = vld [vmem:[%s4 + $0x48] sm:$0xff]
    %v845 = vld [vmem:[%s4 + $0x50] sm:$0xff]
    %v846 = vld [vmem:[%s4 + $0x58] sm:$0xff]
    %v847 = vld [vmem:[%s4 + $0x60] sm:$0xff]
    %v848 = vld [vmem:[%s4 + $0x68] sm:$0xff]
    %v849 = vld [vmem:[%s4 + $0x70] sm:$0xff]
    %v850 = vld [vmem:[%s4 + $0x78] sm:$0xff]
    %851 = vmatprep.subr.mxu0 0.0
    %852 = vmatpush1.msra.mxu0 %v835
    %853 = vmatprep.subr.mxu0 0.0
    %854 = vmatpush1.msra.mxu0 %v836
    %855 = vmatprep.subr.mxu0 0.0
    %856 = vmatpush1.msra.mxu0 %v837
    %857 = vmatprep.subr.mxu0 0.0
    %858 = vmatpush1.msra.mxu0 %v838
    %859 = vmatprep.subr.mxu0 0.0
    %860 = vmatpush1.msra.mxu0 %v839
    %861 = vmatprep.subr.mxu0 0.0
    %862 = vmatpush1.msra.mxu0 %v840
    %863 = vmatprep.subr.mxu0 0.0
    %864 = vmatpush1.msra.mxu0 %v841
    %865 = vmatprep.subr.mxu0 0.0
    %866 = vmatpush1.msra.mxu0 %v842
    %867 = vmatprep.subr.mxu0 0.0
    %868 = vmatpush1.msra.mxu0 %v843
    %869 = vmatprep.subr.mxu0 0.0
    %870 = vmatpush1.msra.mxu0 %v844
    %871 = vmatprep.subr.mxu0 0.0
    %872 = vmatpush1.msra.mxu0 %v845
    %873 = vmatprep.subr.mxu0 0.0
    %874 = vmatpush1.msra.mxu0 %v846
    %875 = vmatprep.subr.mxu0 0.0
    %876 = vmatpush1.msra.mxu0 %v847
    %877 = vmatprep.subr.mxu0 0.0
    %878 = vmatpush1.msra.mxu0 %v848
    %879 = vmatprep.subr.mxu0 0.0
    %880 = vmatpush1.msra.mxu0 %v849
    %881 = vmatprep.subr.mxu0 0.0
    %882 = vmatpush1.msra.mxu0 %v850
    %883 = vmatprep.subr.mxu0 0.0
    %884 = vmatpush1.msra.mxu0 0.0
    %885 = vmatprep.subr.mxu0 0.0
    %886 = vmatpush1.msra.mxu0 0.0
    %887 = vmatprep.subr.mxu0 0.0
    %888 = vmatpush1.msra.mxu0 0.0
    %889 = vmatprep.subr.mxu0 0.0
    %890 = vmatpush1.msra.mxu0 0.0
    %891 = vmatprep.subr.mxu0 0.0
    %892 = vmatpush1.msra.mxu0 0.0
    %893 = vmatprep.subr.mxu0 0.0
    %894 = vmatpush1.msra.mxu0 0.0
    %895 = vmatprep.subr.mxu0 0.0
    %896 = vmatpush1.msra.mxu0 0.0
    %897 = vmatprep.subr.mxu0 0.0
    %898 = vmatpush1.msra.mxu0 0.0
    %899 = vmatprep.subr.mxu0 0.0
    %900 = vmatpush1.msra.mxu0 0.0
    %901 = vmatprep.subr.mxu0 0.0
    %902 = vmatpush1.msra.mxu0 0.0
    %903 = vmatprep.subr.mxu0 0.0
    %904 = vmatpush1.msra.mxu0 0.0
    %905 = vmatprep.subr.mxu0 0.0
    %906 = vmatpush1.msra.mxu0 0.0
    %907 = vmatprep.subr.mxu0 0.0
    %908 = vmatpush1.msra.mxu0 0.0
    %909 = vmatprep.subr.mxu0 0.0
    %910 = vmatpush1.msra.mxu0 0.0
    %911 = vmatprep.subr.mxu0 0.0
    %912 = vmatpush1.msra.mxu0 0.0
    %913 = vmatprep.subr.mxu0 0.0
    %914 = vmatpush1.msra.mxu0 0.0
    %915 = vmatprep.mubr.f32.mxu0 0.0
    %916 = vmatmul.mubr.f32.gmra.mrb[0].mxu0 %v826
    %v917 = vpop.f32.mrb[0].mxu0
    %v918 = vadd.f32 0.0, %v917
    %v919 = vpop.f32.mrb[0].mxu0
    %920 = vmatprep.mubr.f32.mxu0 0.0
    %921 = vmatmul.mubr.f32.gmra.mrb[0].mxu0 %v827
    %v922 = vpop.f32.mrb[0].mxu0
    %v923 = vadd.f32 0.0, %v922
    %v924 = vpop.f32.mrb[0].mxu0
    %925 = vmatprep.mubr.f32.mxu0 0.0
    %926 = vmatmul.mubr.f32.gmra.mrb[0].mxu0 %v828
    %v927 = vpop.f32.mrb[0].mxu0
    %v928 = vadd.f32 0.0, %v927
    %v929 = vpop.f32.mrb[0].mxu0
    %930 = vmatprep.mubr.f32.mxu0 0.0
    %931 = vmatmul.mubr.f32.gmra.mrb[0].mxu0 %v829
    %v932 = vpop.f32.mrb[0].mxu0
    %v933 = vadd.f32 0.0, %v932
    %v934 = vpop.f32.mrb[0].mxu0
    %935 = vmatprep.mubr.f32.mxu0 0.0
    %936 = vmatmul.mubr.f32.gmra.mrb[0].mxu0 %v830
    %v937 = vpop.f32.mrb[0].mxu0
    %v938 = vadd.f32 0.0, %v937
    %v939 = vpop.f32.mrb[0].mxu0
    %940 = vmatprep.mubr.f32.mxu0 0.0
    %941 = vmatmul.mubr.f32.gmra.mrb[0].mxu0 %v831
    %v942 = vpop.f32.mrb[0].mxu0
    %v943 = vadd.f32 0.0, %v942
    %v944 = vpop.f32.mrb[0].mxu0
    %945 = vmatprep.mubr.f32.mxu0 0.0
    %946 = vmatmul.mubr.f32.gmra.mrb[0].mxu0 %v832
    %v947 = vpop.f32.mrb[0].mxu0
    %v948 = vadd.f32 0.0, %v947
    %v949 = vpop.f32.mrb[0].mxu0
    %950 = vmatprep.mubr.f32.mxu0 0.0
    %951 = vmatmul.mubr.f32.gmra.mrb[0].mxu0 %v833
    %v952 = vpop.f32.mrb[0].mxu0
    %v953 = vadd.f32 0.0, %v952
    %v954 = vpop.f32.mrb[0].mxu0
    %955 = vdwg.mxu0
    %v957 = vlaneseq
    %v958 = vshrl.u32 %v957, 7
    %v959 = vsub.s32 0, %v958
    %v960 = vrot.slane %v834, %v959
    %v962 = vadd.f32 %v960, %v918
    %v963 = vadd.f32 %v960, %v923
    %v964 = vadd.f32 %v960, %v928
    %v965 = vadd.f32 %v960, %v933
    %v966 = vadd.f32 %v960, %v938
    %v967 = vadd.f32 %v960, %v943
    %v968 = vadd.f32 %v960, %v948
    %v969 = vadd.f32 %v960, %v953
    %vm970 = vcmask 130048
    %971 = vst.msk [vmem:[#allocation5] sm:$0xff] %vm970, %v962
    %972 = vst.msk [vmem:[#allocation5 + $0x8] sm:$0xff] %vm970, %v963
    %973 = vst.msk [vmem:[#allocation5 + $0x10] sm:$0xff] %vm970, %v964
    %974 = vst.msk [vmem:[#allocation5 + $0x18] sm:$0xff] %vm970, %v965
    %975 = vst.msk [vmem:[#allocation5 + $0x20] sm:$0xff] %vm970, %v966
    %976 = vst.msk [vmem:[#allocation5 + $0x28] sm:$0xff] %vm970, %v967
    %977 = vst.msk [vmem:[#allocation5 + $0x30] sm:$0xff] %vm970, %v968
    %978 = vst.msk [vmem:[#allocation5 + $0x38] sm:$0xff] %vm970, %v969
    // Predicated region
    $region34: #{tpu_custom_call.1} parent=1 // pred_check
      %p979 = pneg %p30
    $region35: #{tpu_custom_call.1} parent=1 // pred_check_branch
      %981 = sbr.rel (%p979) target = $region37
    $region36: #{tpu_custom_call.1} parent=1 // pred_region
      %982 = vst [vmem:[#allocation7] sm:$0xff] %v822
    $region37: #{tpu_custom_call.1} parent=1 // pred_fallthru
      _
    // Predicated region
    $region38: #{tpu_custom_call.1} parent=1 // pred_check
      _
    $region39: #{tpu_custom_call.1} parent=1 // pred_check_branch
      %984 = sbr.rel (0) target = $region41
    $region40: #{tpu_custom_call.1} parent=1 // pred_region
      %s986 = ssub.s32 1024, 1024
      %987 = vsyncadd [#allocation6], %s986
      %s988 = sshll.u32 [#allocation5], 4
      %s989 = int_to_ptr.vmem [resolvable:$true] %s988
      %994 = dma.vmem_to_hbm [thread:$0]  %s989, 1024, %s7, [#allocation6], 128, 128, 8
    $region41: #{tpu_custom_call.1} parent=1 // pred_fallthru
      _
    // Predicated region
    $region42: #{tpu_custom_call.1} parent=1 // pred_check
      _
    $region43: #{tpu_custom_call.1} parent=1 // pred_check_branch
      %996 = sbr.rel (0) target = $region45
    $region44: #{tpu_custom_call.1} parent=1 // pred_region
      %s998 = ssub.s32 128, 128
      %999 = vsyncadd [#allocation8], %s998
      %s1001 = sshll.u32 [#allocation7], 4
      %s1002 = int_to_ptr.vmem [resolvable:$true] %s1001
      %1004 = dma.vmem_to_hbm [thread:$0]  %s1002, 128, %s8, [#allocation8]
    $region45: #{tpu_custom_call.1} parent=1 // pred_fallthru
      _
    // Predicated region
    $region46: #{tpu_custom_call.1} parent=1 // pred_check
      _
    $region47: #{tpu_custom_call.1} parent=1 // pred_check_branch
      %1006 = sbr.rel (0) target = $region49
    $region48: #{tpu_custom_call.1} parent=1 // pred_region
      %1007 = dma.done [#allocation6], 1024
    $region49: #{tpu_custom_call.1} parent=1 // pred_fallthru
      _
    // Predicated region
    $region50: #{tpu_custom_call.1} parent=1 // pred_check
      _
    $region51: #{tpu_custom_call.1} parent=1 // pred_check_branch
      %1009 = sbr.rel (0) target = $region53
    $region52: #{tpu_custom_call.1} parent=1 // pred_region
      %1010 = dma.done [#allocation8], 128
    $region53: #{tpu_custom_call.1} parent=1 // pred_fallthru
      _
    %1011 = vsyncpa [#allocation6], 1
    %1012 = vsyncpa [#allocation8], 1

</llo_original>
